<compile_context>
chip_gen: v7x
topology: tpu7x:2x2x1
jax: 0.10.0
libtpu: 0.0.40
codegen_flags: <defaults>
</compile_context>

<pallas_src>
import jax
import jax.numpy as jnp
from jax.experimental import pallas as pl
from jax.experimental.pallas import tpu as pltpu

_LANE = 128


def _round_up(x: int, m: int) -> int:
    return (x + m - 1) // m * m


def _cdiv(a: int, b: int) -> int:
    return (a + b - 1) // b


def _vmem_capacity_bytes() -> int:
    """Per-core VMEM capacity, generation aware (v5e/v6e: 128 MiB, v7x: 64 MiB)."""
    try:
        info = pltpu.get_tpu_info()
        for attr in ("vmem_capacity_bytes", "vmem_size_bytes", "vmem_bytes"):
            v = getattr(info, attr, None)
            if v:
                return int(v)
    except Exception:
        pass
    try:
        kind = jax.devices()[0].device_kind.lower()
        if "v7" in kind:
            return 64 * 1024 * 1024
        if "v5" in kind or "v6" in kind:
            return 128 * 1024 * 1024
    except Exception:
        pass
    return 64 * 1024 * 1024  # conservative default


def _largest_aligned_divisor(total: int, target: int, align: int) -> int:
    """Largest multiple of `align` that divides `total` (a multiple of `align`) and
    is <= max(target, align)."""
    q = total // align
    cap = max(target, align) // align
    best = 1
    d = 1
    while d * d <= q:
        if q % d == 0:
            for cand in (d, q // d):
                if cand <= cap and cand > best:
                    best = cand
        d += 1
    return best * align


def _pick_row_tile(n: int, target: int, row_align: int) -> int:
    """Row tile ~= target but derived from cdiv so row padding stays < row_align."""
    if n <= row_align:
        return row_align
    n_tiles = max(1, _cdiv(n, target))
    return _round_up(_cdiv(n, n_tiles), row_align)


def _vmem_bytes_resident(tile_m, fp, hp, cp, in_is, out_is):
    """Resident-W1 path: double-buffered x/out blocks, resident weights (counted at 2x,
    conservative for default double buffering), plus kernel temporaries."""
    x_blk = 2 * tile_m * fp * in_is
    w_blk = 2 * (fp * hp + hp * cp) * in_is
    b_blk = 2 * (hp + cp) * 4
    o_blk = 2 * tile_m * cp * out_is
    temps = tile_m * hp * (4 + in_is) + tile_m * cp * 4  # h f32 + MXU cast + out f32
    return x_blk + w_blk + b_blk + o_blk + temps


def _vmem_bytes_streamed(tile_m, tile_k, hp, cp, in_is, out_is):
    """K-streamed path: pipelined x/W1 blocks, resident W2/biases, f32 accumulator,
    plus finalize temporaries."""
    x_blk = 2 * tile_m * tile_k * in_is
    w1_blk = 2 * tile_k * hp * in_is
    w2_blk = 2 * hp * cp * in_is
    b_blk = 2 * (hp + cp) * 4
    o_blk = 2 * tile_m * cp * out_is
    acc = tile_m * hp * 4
    temps = tile_m * hp * (4 + in_is) + tile_m * cp * 4
    return x_blk + w1_blk + w2_blk + b_blk + o_blk + acc + temps


def _mlp_kernel_resident(x_ref, w1_ref, b1_ref, w2_ref, b2_ref, o_ref):
    # Whole-F first matmul (W1 resident in VMEM), bias+ReLU in f32, second matmul.
    h = jnp.dot(x_ref[...], w1_ref[...], preferred_element_type=jnp.float32)
    h = jnp.maximum(h + b1_ref[...], 0.0)
    out = jnp.dot(h.astype(w2_ref.dtype), w2_ref[...],
                  preferred_element_type=jnp.float32)
    o_ref[...] = (out + b2_ref[...]).astype(o_ref.dtype)


def _mlp_kernel_streamed(x_ref, w1_ref, b1_ref, w2_ref, b2_ref, o_ref, acc_ref):
    k = pl.program_id(1)

    @pl.when(k == 0)
    def _init():
        # Fold b1 into the accumulator init: the bias pass hides under the first
        # K step's MXU work instead of sitting in the serial epilogue.
        acc_ref[...] = jnp.broadcast_to(b1_ref[...], acc_ref.shape)

    acc_ref[...] += jnp.dot(x_ref[...], w1_ref[...],
                            preferred_element_type=jnp.float32)

    @pl.when(k == pl.num_programs(1) - 1)
    def _finalize():
        h = jnp.maximum(acc_ref[...], 0.0)
        out = jnp.dot(h.astype(w2_ref.dtype), w2_ref[...],
                      preferred_element_type=jnp.float32)
        o_ref[...] = (out + b2_ref[...]).astype(o_ref.dtype)


def mlp_forward(x, w1, b1, w2, b2, *, tile_m=None, tile_k=None,
                compute_dtype=None, force_streaming=False):
    n, f = x.shape
    h = w1.shape[1]
    c = w2.shape[1]
    b1 = b1.reshape(1, h)
    b2 = b2.reshape(1, c)

    out_dtype = x.dtype
    if compute_dtype is None:
        # Keeps exact module (f32) semantics. Production callers should pass
        # compute_dtype=jnp.bfloat16: halves x/W1/W2 HBM traffic and doubles MXU rate
        # on v6e/v7x; bias/ReLU/accumulation stay f32 either way.
        compute_dtype = x.dtype
    x = x.astype(compute_dtype)
    w1 = w1.astype(compute_dtype)
    w2 = w2.astype(compute_dtype)
    b1 = b1.astype(jnp.float32)
    b2 = b2.astype(jnp.float32)

    in_is = jnp.dtype(compute_dtype).itemsize
    out_is = jnp.dtype(out_dtype).itemsize
    row_align = {4: 8, 2: 16, 1: 32}[in_is]  # sublane packing

    hp = _round_up(h, _LANE)
    cp = _round_up(c, _LANE)
    fp_lane = _round_up(f, _LANE)

    cap = _vmem_capacity_bytes()
    budget = int(cap * 0.70)                     # headroom under physical VMEM
    small_vmem = cap <= 80 * 1024 * 1024         # v7x-like: 64 MiB VMEM, 2 TCs/chip

    # ---- row tile ----
    if tile_m is None:
        target_m = 448 if small_vmem else (640 if in_is <= 2 else 512)
        tile_m = _pick_row_tile(n, target_m, row_align)
        if small_vmem and n >= 2 * row_align and _round_up(n, tile_m) // tile_m < 2:
            # v7x: give the "parallel" row axis >= 2 tiles so both TensorCores work.
            tile_m = _round_up(_cdiv(n, 2), row_align)
    else:
        tile_m = max(row_align, _round_up(int(tile_m), row_align))

    # ---- resident-W1 fast path decision ----
    resident_w_bytes = 2 * (fp_lane * hp + hp * cp) * in_is + 2 * (hp + cp) * 4
    use_resident = (
        not force_streaming
        and resident_w_bytes <= budget // 3
        and _vmem_bytes_resident(row_align, fp_lane, hp, cp, in_is, out_is) <= budget
    )

    if use_resident:
        fp = fp_lane
        while (tile_m > row_align
               and _vmem_bytes_resident(tile_m, fp, hp, cp, in_is, out_is) > budget):
            tile_m = max(row_align, _round_up(tile_m // 2, row_align))
        vmem_est = _vmem_bytes_resident(tile_m, fp, hp, cp, in_is, out_is)
    else:
        if tile_k is None:
            fp = fp_lane
            tile_k = _largest_aligned_divisor(fp, 512, _LANE)  # divisor -> no K waste
        else:
            tile_k = max(_LANE, _round_up(int(tile_k), _LANE))
            fp = _round_up(f, tile_k)
        # Shrink to budget: big K blocks first down to 256, then rows to 256, then the
        # rest (keeps total HBM traffic roughly constant before hurting W1 reuse).
        while _vmem_bytes_streamed(tile_m, tile_k, hp, cp, in_is, out_is) > budget:
            if tile_k > 256:
                tile_k = _largest_aligned_divisor(fp, tile_k // 2, _LANE)
            elif tile_m > 256:
                tile_m = max(row_align, _round_up(tile_m // 2, row_align))
            elif tile_k > _LANE:
                tile_k = _largest_aligned_divisor(fp, tile_k // 2, _LANE)
            elif tile_m > row_align:
                tile_m = max(row_align, _round_up(tile_m // 2, row_align))
            else:
                break
        vmem_est = _vmem_bytes_streamed(tile_m, tile_k, hp, cp, in_is, out_is)

    np_ = _round_up(n, tile_m)

    # Zero padding is exact for this MLP: padded K rows/cols of W1 contribute 0,
    # relu(0)=0 for padded hidden cols, padded H rows of W2 contribute 0.
    xp = jnp.pad(x, ((0, np_ - n), (0, fp - f)))
    w1p = jnp.pad(w1, ((0, fp - f), (0, hp - h)))
    b1p = jnp.pad(b1, ((0, 0), (0, hp - h)))
    w2p = jnp.pad(w2, ((0, hp - h), (0, cp - c)))
    b2p = jnp.pad(b2, ((0, 0), (0, cp - c)))

    hard_cap = cap - 4 * 1024 * 1024
    vmem_limit = int(min(hard_cap, max(32 * 1024 * 1024, int(1.3 * vmem_est))))

    n_row_tiles = np_ // tile_m
    w1_reads = 1 if use_resident else n_row_tiles
    cost = pl.CostEstimate(
        flops=int(2 * np_ * fp * hp + 2 * np_ * hp * cp),
        transcendentals=0,
        bytes_accessed=int(
            xp.size * in_is + w1_reads * w1p.size * in_is + w2p.size * in_is
            + b1p.size * 4 + b2p.size * 4 + np_ * cp * out_is
        ),
    )

    if use_resident:
        grid_spec = pltpu.PrefetchScalarGridSpec(
            num_scalar_prefetch=0,
            grid=(n_row_tiles,),
            in_specs=[
                pl.BlockSpec((tile_m, fp), lambda i: (i, 0)),   # x row tile (streamed)
                pl.BlockSpec((fp, hp), lambda i: (0, 0)),       # W1 (resident)
                pl.BlockSpec((1, hp), lambda i: (0, 0)),        # b1 (resident)
                pl.BlockSpec((hp, cp), lambda i: (0, 0)),       # W2 (resident)
                pl.BlockSpec((1, cp), lambda i: (0, 0)),        # b2 (resident)
            ],
            out_specs=pl.BlockSpec((tile_m, cp), lambda i: (i, 0)),
        )
        kernel = _mlp_kernel_resident
        dims = ("parallel",)
    else:
        grid_spec = pltpu.PrefetchScalarGridSpec(
            num_scalar_prefetch=0,
            grid=(n_row_tiles, fp // tile_k),
            in_specs=[
                pl.BlockSpec((tile_m, tile_k), lambda i, k: (i, k)),  # x row/K tile
                pl.BlockSpec((tile_k, hp), lambda i, k: (k, 0)),      # W1 K tile
                pl.BlockSpec((1, hp), lambda i, k: (0, 0)),           # b1 (resident)
                pl.BlockSpec((hp, cp), lambda i, k: (0, 0)),          # W2 (resident)
                pl.BlockSpec((1, cp), lambda i, k: (0, 0)),           # b2 (resident)
            ],
            out_specs=pl.BlockSpec((tile_m, cp), lambda i, k: (i, 0)),
            scratch_shapes=[pltpu.VMEM((tile_m, hp), jnp.float32)],
        )
        kernel = _mlp_kernel_streamed
        dims = ("parallel", "arbitrary")

    out_padded = pl.pallas_call(
        kernel,
        out_shape=jax.ShapeDtypeStruct((np_, cp), out_dtype),
        grid_spec=grid_spec,
        compiler_params=pltpu.CompilerParams(
            dimension_semantics=dims,
            vmem_limit_bytes=vmem_limit,
        ),
        cost_estimate=cost,
    )(xp, w1p, b1p, w2p, b2p)

    return out_padded[:n, :c]


def init_linear_params(key, fan_in, fan_out, dtype=jnp.float32):
    # Mimics torch.nn.Linear.reset_parameters: U(-1/sqrt(fan_in), 1/sqrt(fan_in)).
    kw, kb = jax.random.split(key)
    bound = 1.0 / float(fan_in) ** 0.5
    w = jax.random.uniform(kw, (fan_in, fan_out), dtype, -bound, bound)
    b = jax.random.uniform(kb, (1, fan_out), dtype, -bound, bound)
    return w, b


def _reference(x, w1, b1, w2, b2):
    return jnp.maximum(x @ w1 + b1, 0.0) @ w2 + b2


if __name__ == "__main__":
    key = jax.random.PRNGKey(0)
    k_x, k_l1, k_l2, k_x2, k_l3, k_l4, k_x3 = jax.random.split(key, 7)

    # Small shapes consistent with the module (data.x is [num_nodes, in_features]).
    n, in_features, hidden_size, num_classes = 8, 32, 16, 4
    x = jax.random.normal(k_x, (n, in_features), jnp.float32)
    w1, b1 = init_linear_params(k_l1, in_features, hidden_size)
    w2, b2 = init_linear_params(k_l2, hidden_size, num_classes)

    # 1) f32, resident-W1 fast path.
    out = jax.block_until_ready(mlp_forward(x, w1, b1, w2, b2))
    ref = _reference(x, w1, b1, w2, b2)
    assert out.shape == (n, num_classes)
    assert jnp.allclose(out, ref, atol=1e-5, rtol=1e-5)

    # 2) bf16 MXU path: operands cast to bf16, bias/ReLU/accumulation stay f32.
    out_bf16 = jax.block_until_ready(
        mlp_forward(x, w1, b1, w2, b2, compute_dtype=jnp.bfloat16)
    )
    xb = x.astype(jnp.bfloat16).astype(jnp.float32)
    w1b = w1.astype(jnp.bfloat16).astype(jnp.float32)
    w2b = w2.astype(jnp.bfloat16).astype(jnp.float32)
    hb = jnp.maximum(xb @ w1b + b1, 0.0).astype(jnp.bfloat16).astype(jnp.float32)
    ref_bf16 = hb @ w2b + b2
    assert out_bf16.shape == (n, num_classes)
    assert jnp.allclose(out_bf16, ref_bf16, atol=1e-2, rtol=1e-2)

    # 3) Resident path with multiple row tiles (auto tiling, uneven n).
    n3, f3, h3, c3 = 300, 64, 32, 10
    x3 = jax.random.normal(k_x3, (n3, f3), jnp.float32)
    w5, b5 = init_linear_params(k_l3, f3, h3)
    w6, b6 = init_linear_params(k_l4, h3, c3)
    out3 = jax.block_until_ready(mlp_forward(x3, w5, b5, w6, b6))
    ref3 = _reference(x3, w5, b5, w6, b6)
    assert out3.shape == (n3, c3)
    assert jnp.allclose(out3, ref3, atol=1e-4, rtol=1e-4)

    # 4) Streamed-K fallback path: several row tiles and multiple K accumulation steps
    #    (bias folded into the accumulator init).
    n2, f2, h2, c2 = 40, 200, 48, 10
    x2 = jax.random.normal(k_x2, (n2, f2), jnp.float32)
    w3, b3 = init_linear_params(k_l3, f2, h2)
    w4, b4 = init_linear_params(k_l4, h2, c2)
    out2 = jax.block_until_ready(
        mlp_forward(x2, w3, b3, w4, b4, tile_m=16, tile_k=128, force_streaming=True)
    )
    ref2 = _reference(x2, w3, b3, w4, b4)
    assert out2.shape == (n2, c2)
    assert jnp.allclose(out2, ref2, atol=1e-4, rtol=1e-4)

    print("KERNEL_OK")
</pallas_src>

<mosaic_0001>
module attributes {stable_mosaic.version = 11 : i64} {
  func.func @_mlp_kernel_resident(%arg0: i32, %arg1: memref<8x128xf32, #tpu.memory_space<vmem>>, %arg2: memref<128x128xf32, #tpu.memory_space<vmem>>, %arg3: memref<1x128xf32, #tpu.memory_space<vmem>>, %arg4: memref<128x128xf32, #tpu.memory_space<vmem>>, %arg5: memref<1x128xf32, #tpu.memory_space<vmem>>, %arg6: memref<8x128xf32, #tpu.memory_space<vmem>>) attributes {dimension_semantics = [#tpu.dimension_semantics<parallel>], iteration_bounds = array<i64: 1>, scalar_prefetch = 0 : i64, scratch_operands = 0 : i64, tpu.core_type = #tpu.core_type<tc>, window_params = [{transform_indices = @transform_0, window_bounds = array<i64: 8, 128>}, {pipeline_mode = #tpu.pipeline_mode<synchronous>, transform_indices = @transform_1, window_bounds = array<i64: 128, 128>}, {pipeline_mode = #tpu.pipeline_mode<synchronous>, transform_indices = @transform_2, window_bounds = array<i64: 1, 128>}, {pipeline_mode = #tpu.pipeline_mode<synchronous>, transform_indices = @transform_3, window_bounds = array<i64: 128, 128>}, {pipeline_mode = #tpu.pipeline_mode<synchronous>, transform_indices = @transform_4, window_bounds = array<i64: 1, 128>}, {transform_indices = @transform_5, window_bounds = array<i64: 8, 128>}]} {
    %c0 = arith.constant 0 : index
    %c0_0 = arith.constant 0 : index
    %0 = vector.load %arg1[%c0, %c0_0] : memref<8x128xf32, #tpu.memory_space<vmem>>, vector<8x128xf32>
    %c0_1 = arith.constant 0 : index
    %c0_2 = arith.constant 0 : index
    %1 = vector.load %arg2[%c0_1, %c0_2] : memref<128x128xf32, #tpu.memory_space<vmem>>, vector<128x128xf32>
    %cst = arith.constant dense<0.000000e+00> : vector<8x128xf32>
    %2 = tpu.matmul %0, %1, %cst {dimension_numbers = #tpu.dot_dimension_numbers<[1], [0], [0], [1], [0, 0, 1, 1], [], []>} : vector<8x128xf32>, vector<128x128xf32>, vector<8x128xf32> -> vector<8x128xf32>
    %c0_3 = arith.constant 0 : index
    %c0_4 = arith.constant 0 : index
    %3 = vector.load %arg3[%c0_3, %c0_4] : memref<1x128xf32, #tpu.memory_space<vmem>>, vector<1x128xf32>
    %4 = vector.broadcast %3 : vector<1x128xf32> to vector<8x128xf32>
    %5 = arith.addf %2, %4 : vector<8x128xf32>
    %cst_5 = arith.constant 0.000000e+00 : f32
    %6 = vector.broadcast %cst_5 : f32 to vector<8x128xf32>
    %7 = arith.maximumf %5, %6 : vector<8x128xf32>
    %c0_6 = arith.constant 0 : index
    %c0_7 = arith.constant 0 : index
    %8 = vector.load %arg4[%c0_6, %c0_7] : memref<128x128xf32, #tpu.memory_space<vmem>>, vector<128x128xf32>
    %cst_8 = arith.constant dense<0.000000e+00> : vector<8x128xf32>
    %9 = tpu.matmul %7, %8, %cst_8 {dimension_numbers = #tpu.dot_dimension_numbers<[1], [0], [0], [1], [0, 0, 1, 1], [], []>} : vector<8x128xf32>, vector<128x128xf32>, vector<8x128xf32> -> vector<8x128xf32>
    %c0_9 = arith.constant 0 : index
    %c0_10 = arith.constant 0 : index
    %10 = vector.load %arg5[%c0_9, %c0_10] : memref<1x128xf32, #tpu.memory_space<vmem>>, vector<1x128xf32>
    %11 = vector.broadcast %10 : vector<1x128xf32> to vector<8x128xf32>
    %12 = arith.addf %9, %11 : vector<8x128xf32>
    %c0_11 = arith.constant 0 : index
    %c0_12 = arith.constant 0 : index
    %13 = vector.load %arg6[%c0_11, %c0_12] : memref<8x128xf32, #tpu.memory_space<vmem>>, vector<8x128xf32>
    tpu.vector_store %arg6[%c0_11, %c0_12], %12 {strides = array<i32>} : memref<8x128xf32, #tpu.memory_space<vmem>>, vector<8x128xf32>,
    return
  }
  func.func @transform_0(%arg0: i32) -> (i32, i32) {
    %c0_i32 = arith.constant 0 : i32
    %c0_i32_0 = arith.constant 0 : i32
    return %arg0, %c0_i32 : i32, i32
  }
  func.func @transform_1(%arg0: i32) -> (i32, i32) {
    %c0_i32 = arith.constant 0 : i32
    %c0_i32_0 = arith.constant 0 : i32
    %c0_i32_1 = arith.constant 0 : i32
    return %c0_i32, %c0_i32_0 : i32, i32
  }
  func.func @transform_2(%arg0: i32) -> (i32, i32) {
    %c0_i32 = arith.constant 0 : i32
    %c0_i32_0 = arith.constant 0 : i32
    %c0_i32_1 = arith.constant 0 : i32
    return %c0_i32, %c0_i32_0 : i32, i32
  }
  func.func @transform_3(%arg0: i32) -> (i32, i32) {
    %c0_i32 = arith.constant 0 : i32
    %c0_i32_0 = arith.constant 0 : i32
    %c0_i32_1 = arith.constant 0 : i32
    return %c0_i32, %c0_i32_0 : i32, i32
  }
  func.func @transform_4(%arg0: i32) -> (i32, i32) {
    %c0_i32 = arith.constant 0 : i32
    %c0_i32_0 = arith.constant 0 : i32
    %c0_i32_1 = arith.constant 0 : i32
    return %c0_i32, %c0_i32_0 : i32, i32
  }
  func.func @transform_5(%arg0: i32) -> (i32, i32) {
    %c0_i32 = arith.constant 0 : i32
    %c0_i32_0 = arith.constant 0 : i32
    return %arg0, %c0_i32 : i32, i32
  }
}

</mosaic_0001>

<llo_original>
// kernel: tpu_custom_call.1
$region0: #{tpu_custom_call.1}
  #allocation0 [shape = 'u32[]', space=smem, size = 0x4, offset = 0x4, fixed_abs, tag = 'smem constant byte address 0x4 - core index']
  #allocation1 [shape = 'u32[144,128]{1,0:T(1,128)}', space=vmem, size = 0x12000, scoped, tag = 'internal scratch']
  %s0 = inlined_call_operand.hbm [shape: f32[8,128], index: 0, kind: input, shape index: {}]
  %s1 = inlined_call_operand.hbm [shape: f32[128,128], index: 1, kind: input, shape index: {}]
  %s2 = inlined_call_operand.vmem [shape: f32[1,128], index: 2, kind: input, shape index: {}]
  %s3 = inlined_call_operand.hbm [shape: f32[128,128], index: 3, kind: input, shape index: {}]
  %s4 = inlined_call_operand.vmem [shape: f32[1,128], index: 4, kind: input, shape index: {}]
  %s5 = inlined_call_operand.hbm [shape: f32[8,128], index: 5, kind: output, shape index: {}]
  %s6 = sld [smem:[#allocation0]]
  $region42: #{tpu_custom_call.1} parent=0
    _
  %s8 = ssub.s32 1, %s6
  %s9 = scalar_select 0, %s8, %s6
  $region1: #{tpu_custom_call.1} parent=0
    #allocation2 [shape = 'u8[4096]{0}', space=vmem, size = 0x1000, scoped, tag = 'input window, operand 0, single buffered']
    #allocation3 [shape = 's32[1]{0}', space=sflag, size = 0x4, scoped, tag = 'scoped memory for tpu_custom_call.1']
    #allocation4 [shape = 's32[1]{0}', space=sflag, size = 0x4, scoped, tag = 'scoped memory for tpu_custom_call.1']
    #allocation5 [shape = 'u8[65536]{0}', space=vmem, size = 0x10000, scoped, tag = 'input window, operand 1, single buffered']
    #allocation6 [shape = 's32[1]{0}', space=sflag, size = 0x4, scoped, tag = 'scoped memory for tpu_custom_call.1']
    #allocation7 [shape = 'u8[65536]{0}', space=vmem, size = 0x10000, scoped, tag = 'input window, operand 3, single buffered']
    #allocation8 [shape = 'u8[4096]{0}', space=vmem, size = 0x1000, scoped, tag = 'output window, operand 0, single buffered']
    %10 = vsyncpa [#allocation3], 0
    %11 = vsyncpa [#allocation6], 0
    %12 = vsyncpa [#allocation4], 0
    // Predicated region
    $region2: #{tpu_custom_call.1} parent=1 // pred_check
      _
    $region3: #{tpu_custom_call.1} parent=1 // pred_check_branch
      %14 = sbr.rel (0) target = $region5
    $region4: #{tpu_custom_call.1} parent=1 // pred_region
      %s16 = ssub.s32 128, 128
      %17 = vsyncadd [#allocation3], %s16
      %s19 = sshll.u32 [#allocation2], 4
      %s20 = int_to_ptr.vmem [resolvable:$true] %s19
      %22 = dma.hbm_to_vmem [thread:$0]  %s0, 128, %s20, [#allocation3]
    $region5: #{tpu_custom_call.1} parent=1 // pred_fallthru
      _
    // Predicated region
    $region6: #{tpu_custom_call.1} parent=1 // pred_check
      _
    $region7: #{tpu_custom_call.1} parent=1 // pred_check_branch
      %24 = sbr.rel (0) target = $region9
    $region8: #{tpu_custom_call.1} parent=1 // pred_region
      %s26 = ssub.s32 2048, 2048
      %27 = vsyncadd [#allocation6], %s26
      %s28 = sshll.u32 [#allocation5], 4
      %s29 = int_to_ptr.vmem [resolvable:$true] %s28
      %34 = dma.hbm_to_vmem [thread:$0]  %s1, 2048, %s29, [#allocation6], 128, 128, 8
    $region9: #{tpu_custom_call.1} parent=1 // pred_fallthru
      _
    // Predicated region
    $region10: #{tpu_custom_call.1} parent=1 // pred_check
      _
    $region11: #{tpu_custom_call.1} parent=1 // pred_check_branch
      %36 = sbr.rel (0) target = $region13
    $region12: #{tpu_custom_call.1} parent=1 // pred_region
      _
    $region13: #{tpu_custom_call.1} parent=1 // pred_fallthru
      _
    // Predicated region
    $region14: #{tpu_custom_call.1} parent=1 // pred_check
      _
    $region15: #{tpu_custom_call.1} parent=1 // pred_check_branch
      %38 = sbr.rel (0) target = $region17
    $region16: #{tpu_custom_call.1} parent=1 // pred_region
      %s40 = ssub.s32 2048, 2048
      %41 = vsyncadd [#allocation6], %s40
      %s42 = sshll.u32 [#allocation7], 4
      %s43 = int_to_ptr.vmem [resolvable:$true] %s42
      %48 = dma.hbm_to_vmem [thread:$0]  %s3, 2048, %s43, [#allocation6], 128, 128, 8
    $region17: #{tpu_custom_call.1} parent=1 // pred_fallthru
      _
    // Predicated region
    $region18: #{tpu_custom_call.1} parent=1 // pred_check
      _
    $region19: #{tpu_custom_call.1} parent=1 // pred_check_branch
      %50 = sbr.rel (0) target = $region21
    $region20: #{tpu_custom_call.1} parent=1 // pred_region
      _
    $region21: #{tpu_custom_call.1} parent=1 // pred_fallthru
      _
    // Predicated region
    $region22: #{tpu_custom_call.1} parent=1 // pred_check
      _
    $region23: #{tpu_custom_call.1} parent=1 // pred_check_branch
      %52 = sbr.rel (0) target = $region25
    $region24: #{tpu_custom_call.1} parent=1 // pred_region
      %53 = dma.done [#allocation3], 128
    $region25: #{tpu_custom_call.1} parent=1 // pred_fallthru
      _
    // Predicated region
    $region26: #{tpu_custom_call.1} parent=1 // pred_check
      _
    $region27: #{tpu_custom_call.1} parent=1 // pred_check_branch
      %55 = sbr.rel (0) target = $region29
    $region28: #{tpu_custom_call.1} parent=1 // pred_region
      %56 = dma.done [#allocation6], 2048
    $region29: #{tpu_custom_call.1} parent=1 // pred_fallthru
      _
    // Predicated region
    $region30: #{tpu_custom_call.1} parent=1 // pred_check
      _
    $region31: #{tpu_custom_call.1} parent=1 // pred_check_branch
      %58 = sbr.rel (0) target = $region33
    $region32: #{tpu_custom_call.1} parent=1 // pred_region
      %59 = dma.done [#allocation6], 2048
    $region33: #{tpu_custom_call.1} parent=1 // pred_fallthru
      _
    %v60 = vld [vmem:[#allocation2] sm:$0xff]
    %v61 = vld [vmem:[#allocation5] sm:$0xff]
    %v62 = vld [vmem:[#allocation5 + $0x8] sm:$0xff]
    %v63 = vld [vmem:[#allocation5 + $0x10] sm:$0xff]
    %v64 = vld [vmem:[#allocation5 + $0x18] sm:$0xff]
    %v65 = vld [vmem:[#allocation5 + $0x20] sm:$0xff]
    %v66 = vld [vmem:[#allocation5 + $0x28] sm:$0xff]
    %v67 = vld [vmem:[#allocation5 + $0x30] sm:$0xff]
    %v68 = vld [vmem:[#allocation5 + $0x38] sm:$0xff]
    %v69 = vld [vmem:[#allocation5 + $0x40] sm:$0xff]
    %v70 = vld [vmem:[#allocation5 + $0x48] sm:$0xff]
    %v71 = vld [vmem:[#allocation5 + $0x50] sm:$0xff]
    %v72 = vld [vmem:[#allocation5 + $0x58] sm:$0xff]
    %v73 = vld [vmem:[#allocation5 + $0x60] sm:$0xff]
    %v74 = vld [vmem:[#allocation5 + $0x68] sm:$0xff]
    %v75 = vld [vmem:[#allocation5 + $0x70] sm:$0xff]
    %v76 = vld [vmem:[#allocation5 + $0x78] sm:$0xff]
    %v77 = vld [vmem:[%s2] sm:$0x1]
    %v79 = vlaneseq
    %v80 = vshrl.u32 %v79, 7
    %v81 = vsub.s32 0, %v80
    %v82 = vrot.slane %v77, %v81
    %84 = vmatprep.subr.mxu0 0.0
    %85 = vmatpush1.msra.mxu0 %v61
    %86 = vmatprep.subr.mxu0 0.0
    %87 = vmatpush1.msra.mxu0 %v62
    %88 = vmatprep.subr.mxu0 0.0
    %89 = vmatpush1.msra.mxu0 %v63
    %90 = vmatprep.subr.mxu0 0.0
    %91 = vmatpush1.msra.mxu0 %v64
    %92 = vmatprep.subr.mxu0 0.0
    %93 = vmatpush1.msra.mxu0 %v65
    %94 = vmatprep.subr.mxu0 0.0
    %95 = vmatpush1.msra.mxu0 %v66
    %96 = vmatprep.subr.mxu0 0.0
    %97 = vmatpush1.msra.mxu0 %v67
    %98 = vmatprep.subr.mxu0 0.0
    %99 = vmatpush1.msra.mxu0 %v68
    %100 = vmatprep.subr.mxu0 0.0
    %101 = vmatpush1.msra.mxu0 %v69
    %102 = vmatprep.subr.mxu0 0.0
    %103 = vmatpush1.msra.mxu0 %v70
    %104 = vmatprep.subr.mxu0 0.0
    %105 = vmatpush1.msra.mxu0 %v71
    %106 = vmatprep.subr.mxu0 0.0
    %107 = vmatpush1.msra.mxu0 %v72
    %108 = vmatprep.subr.mxu0 0.0
    %109 = vmatpush1.msra.mxu0 %v73
    %110 = vmatprep.subr.mxu0 0.0
    %111 = vmatpush1.msra.mxu0 %v74
    %112 = vmatprep.subr.mxu0 0.0
    %113 = vmatpush1.msra.mxu0 %v75
    %114 = vmatprep.subr.mxu0 0.0
    %115 = vmatpush1.msra.mxu0 %v76
    %116 = vmatprep.subr.mxu0 0.0
    %117 = vmatpush1.msra.mxu0 0.0
    %118 = vmatprep.subr.mxu0 0.0
    %119 = vmatpush1.msra.mxu0 0.0
    %120 = vmatprep.subr.mxu0 0.0
    %121 = vmatpush1.msra.mxu0 0.0
    %122 = vmatprep.subr.mxu0 0.0
    %123 = vmatpush1.msra.mxu0 0.0
    %124 = vmatprep.subr.mxu0 0.0
    %125 = vmatpush1.msra.mxu0 0.0
    %126 = vmatprep.subr.mxu0 0.0
    %127 = vmatpush1.msra.mxu0 0.0
    %128 = vmatprep.subr.mxu0 0.0
    %129 = vmatpush1.msra.mxu0 0.0
    %130 = vmatprep.subr.mxu0 0.0
    %131 = vmatpush1.msra.mxu0 0.0
    %132 = vmatprep.subr.mxu0 0.0
    %133 = vmatpush1.msra.mxu0 0.0
    %134 = vmatprep.subr.mxu0 0.0
    %135 = vmatpush1.msra.mxu0 0.0
    %136 = vmatprep.subr.mxu0 0.0
    %137 = vmatpush1.msra.mxu0 0.0
    %138 = vmatprep.subr.mxu0 0.0
    %139 = vmatpush1.msra.mxu0 0.0
    %140 = vmatprep.subr.mxu0 0.0
    %141 = vmatpush1.msra.mxu0 0.0
    %142 = vmatprep.subr.mxu0 0.0
    %143 = vmatpush1.msra.mxu0 0.0
    %144 = vmatprep.subr.mxu0 0.0
    %145 = vmatpush1.msra.mxu0 0.0
    %146 = vmatprep.subr.mxu0 0.0
    %147 = vmatpush1.msra.mxu0 0.0
    %148 = vmatprep.mubr.f32.mxu0 0.0
    %149 = vmatmul.mubr.f32.gmra.mrb[0].mxu0 %v60
    %v150 = vpop.f32.mrb[0].mxu0
    %v151 = vadd.f32 %v82, %v150
    %v152 = vpop.f32.mrb[0].mxu0
    %153 = vdwg.mxu0
    %v154 = vmax.f32 %v151, 0.0
    %v155 = vld [vmem:[#allocation7] sm:$0xff]
    %v156 = vld [vmem:[#allocation7 + $0x8] sm:$0xff]
    %v157 = vld [vmem:[#allocation7 + $0x10] sm:$0xff]
    %v158 = vld [vmem:[#allocation7 + $0x18] sm:$0xff]
    %v159 = vld [vmem:[#allocation7 + $0x20] sm:$0xff]
    %v160 = vld [vmem:[#allocation7 + $0x28] sm:$0xff]
    %v161 = vld [vmem:[#allocation7 + $0x30] sm:$0xff]
    %v162 = vld [vmem:[#allocation7 + $0x38] sm:$0xff]
    %v163 = vld [vmem:[#allocation7 + $0x40] sm:$0xff]
    %v164 = vld [vmem:[#allocation7 + $0x48] sm:$0xff]
    %v165 = vld [vmem:[#allocation7 + $0x50] sm:$0xff]
    %v166 = vld [vmem:[#allocation7 + $0x58] sm:$0xff]
    %v167 = vld [vmem:[#allocation7 + $0x60] sm:$0xff]
    %v168 = vld [vmem:[#allocation7 + $0x68] sm:$0xff]
    %v169 = vld [vmem:[#allocation7 + $0x70] sm:$0xff]
    %v170 = vld [vmem:[#allocation7 + $0x78] sm:$0xff]
    %v171 = vld [vmem:[%s4] sm:$0x1]
    %v173 = vlaneseq
    %v174 = vshrl.u32 %v173, 7
    %v175 = vsub.s32 0, %v174
    %v176 = vrot.slane %v171, %v175
    %178 = vmatprep.subr.mxu0 0.0
    %179 = vmatpush1.msra.mxu0 %v155
    %180 = vmatprep.subr.mxu0 0.0
    %181 = vmatpush1.msra.mxu0 %v156
    %182 = vmatprep.subr.mxu0 0.0
    %183 = vmatpush1.msra.mxu0 %v157
    %184 = vmatprep.subr.mxu0 0.0
    %185 = vmatpush1.msra.mxu0 %v158
    %186 = vmatprep.subr.mxu0 0.0
    %187 = vmatpush1.msra.mxu0 %v159
    %188 = vmatprep.subr.mxu0 0.0
    %189 = vmatpush1.msra.mxu0 %v160
    %190 = vmatprep.subr.mxu0 0.0
    %191 = vmatpush1.msra.mxu0 %v161
    %192 = vmatprep.subr.mxu0 0.0
    %193 = vmatpush1.msra.mxu0 %v162
    %194 = vmatprep.subr.mxu0 0.0
    %195 = vmatpush1.msra.mxu0 %v163
    %196 = vmatprep.subr.mxu0 0.0
    %197 = vmatpush1.msra.mxu0 %v164
    %198 = vmatprep.subr.mxu0 0.0
    %199 = vmatpush1.msra.mxu0 %v165
    %200 = vmatprep.subr.mxu0 0.0
    %201 = vmatpush1.msra.mxu0 %v166
    %202 = vmatprep.subr.mxu0 0.0
    %203 = vmatpush1.msra.mxu0 %v167
    %204 = vmatprep.subr.mxu0 0.0
    %205 = vmatpush1.msra.mxu0 %v168
    %206 = vmatprep.subr.mxu0 0.0
    %207 = vmatpush1.msra.mxu0 %v169
    %208 = vmatprep.subr.mxu0 0.0
    %209 = vmatpush1.msra.mxu0 %v170
    %210 = vmatprep.subr.mxu0 0.0
    %211 = vmatpush1.msra.mxu0 0.0
    %212 = vmatprep.subr.mxu0 0.0
    %213 = vmatpush1.msra.mxu0 0.0
    %214 = vmatprep.subr.mxu0 0.0
    %215 = vmatpush1.msra.mxu0 0.0
    %216 = vmatprep.subr.mxu0 0.0
    %217 = vmatpush1.msra.mxu0 0.0
    %218 = vmatprep.subr.mxu0 0.0
    %219 = vmatpush1.msra.mxu0 0.0
    %220 = vmatprep.subr.mxu0 0.0
    %221 = vmatpush1.msra.mxu0 0.0
    %222 = vmatprep.subr.mxu0 0.0
    %223 = vmatpush1.msra.mxu0 0.0
    %224 = vmatprep.subr.mxu0 0.0
    %225 = vmatpush1.msra.mxu0 0.0
    %226 = vmatprep.subr.mxu0 0.0
    %227 = vmatpush1.msra.mxu0 0.0
    %228 = vmatprep.subr.mxu0 0.0
    %229 = vmatpush1.msra.mxu0 0.0
    %230 = vmatprep.subr.mxu0 0.0
    %231 = vmatpush1.msra.mxu0 0.0
    %232 = vmatprep.subr.mxu0 0.0
    %233 = vmatpush1.msra.mxu0 0.0
    %234 = vmatprep.subr.mxu0 0.0
    %235 = vmatpush1.msra.mxu0 0.0
    %236 = vmatprep.subr.mxu0 0.0
    %237 = vmatpush1.msra.mxu0 0.0
    %238 = vmatprep.subr.mxu0 0.0
    %239 = vmatpush1.msra.mxu0 0.0
    %240 = vmatprep.subr.mxu0 0.0
    %241 = vmatpush1.msra.mxu0 0.0
    %242 = vmatprep.mubr.f32.mxu0 0.0
    %243 = vmatmul.mubr.f32.gmra.mrb[0].mxu0 %v154
    %v244 = vpop.f32.mrb[0].mxu0
    %v245 = vadd.f32 %v176, %v244
    %v246 = vpop.f32.mrb[0].mxu0
    %247 = vdwg.mxu0
    %248 = vst [vmem:[#allocation8] sm:$0xff] %v245
    // Predicated region
    $region34: #{tpu_custom_call.1} parent=1 // pred_check
      _
    $region35: #{tpu_custom_call.1} parent=1 // pred_check_branch
      %250 = sbr.rel (0) target = $region37
    $region36: #{tpu_custom_call.1} parent=1 // pred_region
      %s252 = ssub.s32 128, 128
      %253 = vsyncadd [#allocation4], %s252
      %s255 = sshll.u32 [#allocation8], 4
      %s256 = int_to_ptr.vmem [resolvable:$true] %s255
      %258 = dma.vmem_to_hbm [thread:$0]  %s256, 128, %s5, [#allocation4]
    $region37: #{tpu_custom_call.1} parent=1 // pred_fallthru
      _
    // Predicated region
    $region38: #{tpu_custom_call.1} parent=1 // pred_check
      _
    $region39: #{tpu_custom_call.1} parent=1 // pred_check_branch
      %260 = sbr.rel (0) target = $region41
    $region40: #{tpu_custom_call.1} parent=1 // pred_region
      %261 = dma.done [#allocation4], 128
    $region41: #{tpu_custom_call.1} parent=1 // pred_fallthru
      _
    %262 = vsyncpa [#allocation3], 1
    %263 = vsyncpa [#allocation6], 1
    %264 = vsyncpa [#allocation4], 1

</llo_original>
